<compile_context>
chip_gen: v6e
topology: v6e:2x2x1
jax: 0.10.0
libtpu: 0.0.40
codegen_flags: <defaults>
</compile_context>

<pallas_src>
import numpy as np
import jax
import jax.numpy as jnp
from jax.experimental import pallas as pl
from jax.experimental.pallas import tpu as pltpu


# ----------------------------------------------------------------------------
# Deterministic filter design (pure numpy; mirrors scipy.signal.butter for the
# bandpass case used by this configuration, and sosfreqz's frequency grid).
# ----------------------------------------------------------------------------
_NOM_FREQ_F1 = [16, 31.5, 63, 125, 250, 500, 1000, 2000, 4000, 8000, 16000, 32000]
_NOM_FREQ_F3 = [16, 20, 25, 31.5, 40, 50, 63, 80, 100, 125, 160, 200, 250, 315,
                400, 500, 630, 800, 1000, 1250, 1600, 2000, 2500, 3150, 4000,
                5000, 6300, 8000, 10000, 12500, 16000, 20000, 25000, 32000]


def _center_frequencies(fraction, fmin, fmax):
    if fraction == 1:
        index = [0, len(_NOM_FREQ_F1)]
        for i, f in enumerate(_NOM_FREQ_F1):
            if fmin > f:
                index[0] = i
                break
        for i, f in enumerate(_NOM_FREQ_F1):
            if f > fmax:
                index[1] = i
                break
        return _NOM_FREQ_F1[index[0]:index[1]]
    else:  # fraction == 3
        index = [0, len(_NOM_FREQ_F3)]
        for i, f in enumerate(_NOM_FREQ_F3):
            if fmin > f:
                index[0] = i + 1
                break
        for i, f in enumerate(_NOM_FREQ_F3):
            if f > fmax:
                index[1] = i
                break
        return _NOM_FREQ_F3[index[0]:index[1]]


def _butter_bandpass_zpk(order, f_lo, f_hi, fs):
    """Digital Butterworth bandpass (bilinear transform), as scipy.signal.butter."""
    Wn = np.array([f_lo, f_hi], dtype=np.float64) / (fs / 2.0)
    fs_i = 2.0
    warped = 2.0 * fs_i * np.tan(np.pi * Wn / fs_i)
    # analog lowpass prototype (buttap)
    N = order
    p = -np.exp(1j * np.pi * np.arange(-N + 1, N, 2) / (2.0 * N))
    z = np.array([], dtype=np.complex128)
    k = 1.0
    # lp2bp_zpk
    bw = warped[1] - warped[0]
    wo = np.sqrt(warped[0] * warped[1])
    degree = len(p) - len(z)
    z_lp = z * bw / 2.0
    p_lp = p * bw / 2.0
    z_bp = np.concatenate([z_lp + np.sqrt(z_lp ** 2 - wo ** 2),
                           z_lp - np.sqrt(z_lp ** 2 - wo ** 2)])
    p_bp = np.concatenate([p_lp + np.sqrt(p_lp ** 2 - wo ** 2),
                           p_lp - np.sqrt(p_lp ** 2 - wo ** 2)])
    z_bp = np.append(z_bp, np.zeros(degree))
    k_bp = k * bw ** degree
    # bilinear_zpk
    fs2 = 2.0 * fs_i
    degree2 = len(p_bp) - len(z_bp)
    z_z = (fs2 + z_bp) / (fs2 - z_bp)
    p_z = (fs2 + p_bp) / (fs2 - p_bp)
    z_z = np.append(z_z, -np.ones(degree2))
    k_z = k_bp * np.real(np.prod(fs2 - z_bp) / np.prod(fs2 - p_bp))
    return z_z, p_z, k_z


def _zpk_freq_response(z, p, k, n_points):
    """Frequency response at w = linspace(0, pi, n, endpoint=False) (sosfreqz grid)."""
    w = np.linspace(0.0, np.pi, n_points, endpoint=False)
    ejw = np.exp(1j * w)
    num = k * np.prod(ejw[:, None] - z[None, :], axis=1)
    den = np.prod(ejw[:, None] - p[None, :], axis=1)
    return num / den


def make_filterbank_freqz(nfft, fraction=3, order=5, fmin=20.0, fmax=18000.0,
                          sample_rate=48000):
    """freqz[k, :] = cascaded-SOS frequency response of band k (complex128)."""
    cfs = _center_frequencies(fraction, fmin, fmax)
    freqz = np.zeros((len(cfs), nfft), dtype=np.complex128)
    for i, cf in enumerate(cfs):
        # TODO(synk): lowpass/highpass edge bands (center == 0 or fs/2) not needed
        # for this configuration; only the bandpass branch is implemented.
        f_cut = cf * np.array([1.0 / np.sqrt(2.0), np.sqrt(2.0)])
        z, p, k = _butter_bandpass_zpk(order, f_cut[0], f_cut[1], sample_rate)
        freqz[i, :] = _zpk_freq_response(z, p, k, nfft)
    return freqz


# ----------------------------------------------------------------------------
# Host-side operator construction (float64, done ONCE per configuration).
# ----------------------------------------------------------------------------
def make_filterbank_operator(freqz, T):
    """A[k] = irfft(diag(H_k) @ rfft(I_T)): real (T, T) operator of band k."""
    nfft = freqz.shape[1]
    assert nfft == T // 2 + 1, (nfft, T)
    F = np.fft.rfft(np.eye(T, dtype=np.float64), axis=0)               # (nfft, T)
    A = np.fft.irfft(freqz[:, :, None] * F[None, :, :], n=T, axis=1)   # (K, T, T)
    return A  # float64


def _round_up(x, m):
    return ((x + m - 1) // m) * m


def _ceil_div(x, m):
    return -(-x // m)


def _tensorcores_per_chip():
    """Dual-TC chips (v4/v5p/v7x) want >=2 'parallel' tiles; v5e/v6e want 1."""
    try:
        kind = jax.devices()[0].device_kind.lower()
    except Exception:
        return 1
    return 2 if any(tag in kind for tag in ("v4", "v5p", "7")) else 1


def _vmem_capacity_bytes():
    """Per-TC VMEM (v7x: 64 MiB, v5e/v6e: 128 MiB); conservative fallback."""
    try:
        return int(pltpu.get_tpu_info().vmem_capacity_bytes)
    except Exception:
        return 64 * 1024 * 1024


# ----------------------------------------------------------------------------
# Pallas kernel: one fused, lane-dense MXU matmul; fused K*T axis on lanes.
# ----------------------------------------------------------------------------
def _filterbank_matmul_kernel(x_ref, a_ref, o_ref):
    # x_ref: (BNp, Tp)   resident input operand (constant across grid steps)
    # a_ref: (Tp, tn)    lane tile of the packed band operator A^T
    # o_ref: (BNp, tn)   lane-dense output tile (unmasked wide vst)
    o_ref[...] = jnp.dot(x_ref[...], a_ref[...],
                         preferred_element_type=jnp.float32).astype(o_ref.dtype)


def build_filterbank(freqz, *, T, B, N, compute_dtype=jnp.bfloat16,
                     out_dtype=jnp.float32, vmem_budget_bytes=None,
                     reference_layout=True):
    """Returns (apply, K) with apply(x: (B,T,N) f32) -> (B,T,N,K),
    matching the torch 'conv' backend (torch.stack over bands, dim=-1).
    With reference_layout=False, apply returns the raw band-major (B,N,K,T)
    slab so consumers can skip the final transpose."""
    K = freqz.shape[0]
    A = make_filterbank_operator(freqz, T)          # (K, T, T) float64, host-side

    in_bytes = np.dtype(compute_dtype).itemsize
    out_bytes = np.dtype(out_dtype).itemsize

    BN = B * N
    BNp = _round_up(BN, 16)       # sublane padding only (covers bf16 packing)
    Tp = _round_up(T, 16)         # contraction axis (zero-padded -> no effect)
    M = K * T                     # fused (band, time_out) axis -> LANES

    # ------------------- generation-aware grid / VMEM sizing -----------------
    n_cores = _tensorcores_per_chip()
    if vmem_budget_bytes is None:
        # v7x: ~48 MiB of its 64 MiB/TC; v5e/v6e capped at 64 MiB of 128 MiB.
        vmem_budget_bytes = min(_vmem_capacity_bytes() * 3 // 4, 64 * 1024 * 1024)

    def _working_set(tn_):
        # double-buffered A^T lane tile + (constant but still double-buffered,
        # ~1 KiB) X^T + double-buffered output tile.
        return (2 * Tp * tn_ * in_bytes
                + 2 * BNp * Tp * in_bytes
                + 2 * BNp * tn_ * out_bytes)

    # 1 lane tile on single-TC parts; >=2 even tiles on dual-TC parts so the
    # "parallel" axis shards across both cores.  Never create fully-padded tiles.
    n_tiles = max(1, min(n_cores, _ceil_div(M, 128)))
    tn = _round_up(_ceil_div(M, n_tiles), 128)
    while _working_set(tn) > vmem_budget_bytes and tn > 128:
        n_tiles *= 2
        tn = _round_up(_ceil_div(M, n_tiles), 128)
    Mp = tn * n_tiles

    # Pack the operator once on the host, already transposed so the fused K*T
    # axis lands on lanes: AT[s, k*T + t_out] = A[k, t_out, s].
    AT = np.zeros((Tp, Mp), dtype=np.float64)
    AT[:T, :M] = A.reshape(M, T).T
    a_dev = jnp.asarray(AT, dtype=compute_dtype)

    cost = pl.CostEstimate(
        flops=2 * BNp * Tp * Mp,
        transcendentals=0,
        bytes_accessed=(BNp * Tp + Tp * Mp) * in_bytes + BNp * Mp * out_bytes,
    )

    matmul = pl.pallas_call(
        _filterbank_matmul_kernel,
        out_shape=jax.ShapeDtypeStruct((BNp, Mp), out_dtype),
        grid=(n_tiles,),
        in_specs=[
            pl.BlockSpec((BNp, Tp), lambda i: (0, 0)),   # X^T (constant per step)
            pl.BlockSpec((Tp, tn), lambda i: (0, i)),    # A^T lane tile
        ],
        out_specs=pl.BlockSpec((BNp, tn), lambda i: (0, i)),
        compiler_params=pltpu.CompilerParams(
            dimension_semantics=("parallel",),
            vmem_limit_bytes=int(vmem_budget_bytes)),
        cost_estimate=cost,
    )

    @jax.jit
    def apply(x):
        # (B, T, N) -> X^T (BNp, Tp): a ~1 KiB relayout (the 15x larger output
        # comes out of the kernel already lane-dense).
        xt = jnp.transpose(x, (0, 2, 1)).reshape(BN, T)
        xt = jnp.pad(xt, ((0, BNp - BN), (0, Tp - T))).astype(compute_dtype)
        o = matmul(xt, a_dev)                        # (BNp, Mp)
        o = o[:BN, :M].reshape(B, N, K, T)           # raw band-major slab
        if not reference_layout:
            return o
        # == torch.stack(out, dim=-1): (B, T, N, K)
        return jnp.transpose(o, (0, 3, 1, 2))

    return apply, K


# ----------------------------------------------------------------------------
# Pure float64 numpy reference of the torch 'conv' backend (for verification).
# ----------------------------------------------------------------------------
def _reference_forward_np(x, freqz):
    x64 = np.asarray(x, dtype=np.float64)
    T = x64.shape[1]
    X = np.fft.rfft(x64, axis=1)                       # (B, nfft, N)
    Y = X[:, None, :, :] * freqz[None, :, :, None]     # (B, K, nfft, N)
    y = np.fft.irfft(Y, n=T, axis=2)                   # (B, K, T, N)
    return np.transpose(y, (0, 2, 3, 1))               # (B, T, N, K)


if __name__ == "__main__":
    # Small shapes consistent with the module: batch=2, time T=16, channels N=8.
    B, T, N = 2, 16, 8
    sample_rate = 48000
    nfft = T // 2 + 1  # reference default: x.size(1) // 2 + 1

    freqz = make_filterbank_freqz(nfft, fraction=3, order=5, fmin=20.0,
                                  fmax=18000.0, sample_rate=sample_rate)

    key = jax.random.PRNGKey(0)
    x = jax.random.normal(key, (B, T, N), dtype=jnp.float32)

    # Default bf16 MXU path (f32 accumulation) + f32-operand path for the
    # tight numerical check.
    apply_bf16, K = build_filterbank(freqz, T=T, B=B, N=N,
                                     compute_dtype=jnp.bfloat16)
    apply_f32, _ = build_filterbank(freqz, T=T, B=B, N=N,
                                    compute_dtype=jnp.float32)

    out = jax.block_until_ready(apply_bf16(x))
    out_f32 = jax.block_until_ready(apply_f32(x))

    ref = _reference_forward_np(np.asarray(x), freqz)
    assert out.shape == (B, T, N, K), out.shape
    # f32 operands: tight check against the float64 FFT reference.
    assert np.allclose(np.asarray(out_f32), ref, rtol=1e-3, atol=1e-4), \
        "f32 Pallas output mismatch vs float64 reference"
    # bf16 operands: pure input/operator quantization error (accumulation is
    # f32 on the MXU); for higher order / longer T use the f32-operand build.
    assert np.allclose(np.asarray(out), ref, rtol=2e-2, atol=4e-2), \
        "bf16 Pallas output mismatch vs float64 reference"

    print("KERNEL_OK")
</pallas_src>

<mosaic_0001>
module attributes {stable_mosaic.version = 11 : i64} {
  func.func @_filterbank_matmul_kernel(%arg0: i32, %arg1: memref<16x16xbf16, #tpu.memory_space<vmem>>, %arg2: memref<16x512xbf16, #tpu.memory_space<vmem>>, %arg3: memref<16x512xf32, #tpu.memory_space<vmem>>) attributes {dimension_semantics = [#tpu.dimension_semantics<parallel>], iteration_bounds = array<i64: 1>, scalar_prefetch = 0 : i64, scratch_operands = 0 : i64, tpu.core_type = #tpu.core_type<tc>, window_params = [{pipeline_mode = #tpu.pipeline_mode<synchronous>, transform_indices = @transform_0, window_bounds = array<i64: 16, 16>}, {transform_indices = @transform_1, window_bounds = array<i64: 16, 512>}, {transform_indices = @transform_2, window_bounds = array<i64: 16, 512>}]} {
    %c0 = arith.constant 0 : index
    %c0_0 = arith.constant 0 : index
    %0 = vector.load %arg1[%c0, %c0_0] : memref<16x16xbf16, #tpu.memory_space<vmem>>, vector<16x16xbf16>
    %c0_1 = arith.constant 0 : index
    %c0_2 = arith.constant 0 : index
    %1 = vector.load %arg2[%c0_1, %c0_2] : memref<16x512xbf16, #tpu.memory_space<vmem>>, vector<16x512xbf16>
    %cst = arith.constant dense<0.000000e+00> : vector<16x512xf32>
    %2 = tpu.matmul %0, %1, %cst {dimension_numbers = #tpu.dot_dimension_numbers<[1], [0], [0], [1], [0, 0, 1, 1], [], []>} : vector<16x16xbf16>, vector<16x512xbf16>, vector<16x512xf32> -> vector<16x512xf32>
    %c0_3 = arith.constant 0 : index
    %c0_4 = arith.constant 0 : index
    %3 = vector.load %arg3[%c0_3, %c0_4] : memref<16x512xf32, #tpu.memory_space<vmem>>, vector<16x512xf32>
    tpu.vector_store %arg3[%c0_3, %c0_4], %2 {strides = array<i32>} : memref<16x512xf32, #tpu.memory_space<vmem>>, vector<16x512xf32>,
    return
  }
  func.func @transform_0(%arg0: i32) -> (i32, i32) {
    %c0_i32 = arith.constant 0 : i32
    %c0_i32_0 = arith.constant 0 : i32
    %c0_i32_1 = arith.constant 0 : i32
    return %c0_i32, %c0_i32_0 : i32, i32
  }
  func.func @transform_1(%arg0: i32) -> (i32, i32) {
    %c0_i32 = arith.constant 0 : i32
    %c0_i32_0 = arith.constant 0 : i32
    return %c0_i32, %arg0 : i32, i32
  }
  func.func @transform_2(%arg0: i32) -> (i32, i32) {
    %c0_i32 = arith.constant 0 : i32
    %c0_i32_0 = arith.constant 0 : i32
    return %c0_i32, %arg0 : i32, i32
  }
}

</mosaic_0001>

<llo_original>
// kernel: apply.1
$region0: #{apply.1}
  #allocation0 [shape = 'u32[]', space=smem, size = 0x4, offset = 0x4, fixed_abs, tag = 'smem constant byte address 0x4 - core index']
  #allocation1 [shape = 'u32[144,128]{1,0:T(1,128)}', space=vmem, size = 0x12000, scoped, tag = 'internal scratch']
  %s0 = inlined_call_operand.vmem [shape: bf16[16,16], index: 0, kind: input, shape index: {}]
  %s1 = inlined_call_operand.hbm [shape: bf16[16,512], index: 1, kind: input, shape index: {}]
  %s2 = inlined_call_operand.vmem [shape: f32[16,512], index: 2, kind: output, shape index: {}]
  %s3 = sld [smem:[#allocation0]]
  $region22: #{apply.1} parent=0
    _
  %s5 = ssub.s32 1, %s3
  %s6 = scalar_select 0, %s5, %s3
  $region1: #{apply.1} parent=0
    #allocation2 [shape = 'u8[16384]{0}', space=vmem, size = 0x4000, scoped, tag = 'input window, operand 1, single buffered']
    #allocation3 [shape = 's32[1]{0}', space=sflag, size = 0x4, scoped, tag = 'scoped memory for apply.1']
    %7 = vsyncpa [#allocation3], 0
    // Predicated region
    $region2: #{apply.1} parent=1 // pred_check
      _
    $region3: #{apply.1} parent=1 // pred_check_branch
      %9 = sbr.rel (0) target = $region5
    $region4: #{apply.1} parent=1 // pred_region
      _
    $region5: #{apply.1} parent=1 // pred_fallthru
      _
    // Predicated region
    $region6: #{apply.1} parent=1 // pred_check
      _
    $region7: #{apply.1} parent=1 // pred_check_branch
      %11 = sbr.rel (0) target = $region9
    $region8: #{apply.1} parent=1 // pred_region
      %s13 = ssub.s32 512, 512
      %14 = vsyncadd [#allocation3], %s13
      %s15 = sshll.u32 [#allocation2], 4
      %s16 = int_to_ptr.vmem [resolvable:$true] %s15
      %21 = dma.hbm_to_vmem [thread:$0]  %s1, 512, %s16, [#allocation3], 256, 256, 16
    $region9: #{apply.1} parent=1 // pred_fallthru
      _
    // Predicated region
    $region10: #{apply.1} parent=1 // pred_check
      _
    $region11: #{apply.1} parent=1 // pred_check_branch
      %23 = sbr.rel (0) target = $region13
    $region12: #{apply.1} parent=1 // pred_region
      %24 = dma.done [#allocation3], 512
    $region13: #{apply.1} parent=1 // pred_fallthru
      _
    %v26 = vld [vmem:[%s0] sm:$0xf]
    %v27 = vld [vmem:[%s0 + $0x4] sm:$0xf]
    %v28 = vld [vmem:[#allocation2] sm:$0xff]
    %v29 = vld [vmem:[#allocation2 + $0x8] sm:$0xff]
    %v30 = vld [vmem:[#allocation2 + $0x10] sm:$0xff]
    %v31 = vld [vmem:[#allocation2 + $0x18] sm:$0xff]
    %v34 = vunpack.c.l.b16 %v26
    %v35 = vunpack.c.l.b16 %v27
    %v36 = vpack.c.b16 %v35, %v34
    %v41 = vunpack.c.l.b16 %v28
    %v42 = vunpack.c.h.b16 %v28
    %v43 = vunpack.c.l.b16 %v29
    %v44 = vunpack.c.h.b16 %v29
    %v45 = vunpack.c.l.b16 %v30
    %v46 = vunpack.c.h.b16 %v30
    %v47 = vunpack.c.l.b16 %v31
    %v48 = vunpack.c.h.b16 %v31
    %v49 = vpack.c.b16 %v45, %v41
    %v50 = vpack.c.b16 %v46, %v42
    %v51 = vpack.c.b16 %v47, %v43
    %v52 = vpack.c.b16 %v48, %v44
    %vm57 = vcmask 130048
    %v59 = vsel %vm57, %v36, 0
    %61 = vmatprep.subr.bf16.mxu0 0
    %62 = vmatpush1.bf16.msra.mxu0 0
    %63 = vmatprep.subr.bf16.mxu0 0
    %64 = vmatpush1.bf16.msra.mxu0 0
    %65 = vmatprep.subr.bf16.mxu0 0
    %66 = vmatpush1.bf16.msra.mxu0 0
    %67 = vmatprep.subr.bf16.mxu0 0
    %68 = vmatpush1.bf16.msra.mxu0 0
    %69 = vmatprep.subr.bf16.mxu0 0
    %70 = vmatpush1.bf16.msra.mxu0 0
    %71 = vmatprep.subr.bf16.mxu0 0
    %72 = vmatpush1.bf16.msra.mxu0 0
    %73 = vmatprep.subr.bf16.mxu0 0
    %74 = vmatpush1.bf16.msra.mxu0 0
    %75 = vmatprep.subr.bf16.mxu0 %v50
    %76 = vmatpush1.bf16.msra.mxu0 %v49
    %77 = vmatprep.subr.bf16.mxu0 0
    %78 = vmatpush2.bf16.msra.mxu0 0
    %79 = vmatprep.subr.bf16.mxu0 0
    %80 = vmatpush2.bf16.msra.mxu0 0
    %81 = vmatprep.subr.bf16.mxu0 0
    %82 = vmatpush2.bf16.msra.mxu0 0
    %83 = vmatprep.subr.bf16.mxu0 0
    %84 = vmatpush2.bf16.msra.mxu0 0
    %85 = vmatprep.subr.bf16.mxu0 0
    %86 = vmatpush2.bf16.msra.mxu0 0
    %87 = vmatprep.subr.bf16.mxu0 0
    %88 = vmatpush2.bf16.msra.mxu0 0
    %89 = vmatprep.subr.bf16.mxu0 0
    %90 = vmatpush2.bf16.msra.mxu0 0
    %91 = vmatprep.subr.bf16.mxu0 0
    %92 = vmatpush2.bf16.msra.mxu0 0
    %93 = vmatprep.mubr.bf16.mxu0 0
    %94 = vmatmul.mubr.bf16.gmra.mxu0 %v59
    %v95 = vpop.f32.mrf.mxu0
    %v96 = vadd.f32 0.0, %v95
    %v97 = vpop.f32.mrf.mxu0
    %v98 = vadd.f32 0.0, %v97
    %v99 = vpop.f32.mrf.mxu0
    %v100 = vadd.f32 0.0, %v99
    %v101 = vpop.f32.mrf.mxu0
    %v102 = vadd.f32 0.0, %v101
    %103 = vdwg.mxu0
    %104 = vmatprep.subr.bf16.mxu0 0
    %105 = vmatpush1.bf16.msra.mxu0 0
    %106 = vmatprep.subr.bf16.mxu0 0
    %107 = vmatpush1.bf16.msra.mxu0 0
    %108 = vmatprep.subr.bf16.mxu0 0
    %109 = vmatpush1.bf16.msra.mxu0 0
    %110 = vmatprep.subr.bf16.mxu0 0
    %111 = vmatpush1.bf16.msra.mxu0 0
    %112 = vmatprep.subr.bf16.mxu0 0
    %113 = vmatpush1.bf16.msra.mxu0 0
    %114 = vmatprep.subr.bf16.mxu0 0
    %115 = vmatpush1.bf16.msra.mxu0 0
    %116 = vmatprep.subr.bf16.mxu0 0
    %117 = vmatpush1.bf16.msra.mxu0 0
    %118 = vmatprep.subr.bf16.mxu0 %v52
    %119 = vmatpush1.bf16.msra.mxu0 %v51
    %120 = vmatprep.subr.bf16.mxu0 0
    %121 = vmatpush2.bf16.msra.mxu0 0
    %122 = vmatprep.subr.bf16.mxu0 0
    %123 = vmatpush2.bf16.msra.mxu0 0
    %124 = vmatprep.subr.bf16.mxu0 0
    %125 = vmatpush2.bf16.msra.mxu0 0
    %126 = vmatprep.subr.bf16.mxu0 0
    %127 = vmatpush2.bf16.msra.mxu0 0
    %128 = vmatprep.subr.bf16.mxu0 0
    %129 = vmatpush2.bf16.msra.mxu0 0
    %130 = vmatprep.subr.bf16.mxu0 0
    %131 = vmatpush2.bf16.msra.mxu0 0
    %132 = vmatprep.subr.bf16.mxu0 0
    %133 = vmatpush2.bf16.msra.mxu0 0
    %134 = vmatprep.subr.bf16.mxu0 0
    %135 = vmatpush2.bf16.msra.mxu0 0
    %136 = vmatprep.mubr.bf16.mxu0 0
    %137 = vmatmul.mubr.bf16.gmra.mxu0 %v59
    %v138 = vpop.f32.mrf.mxu0
    %v139 = vadd.f32 0.0, %v138
    %v140 = vpop.f32.mrf.mxu0
    %v141 = vadd.f32 0.0, %v140
    %v142 = vpop.f32.mrf.mxu0
    %v143 = vadd.f32 0.0, %v142
    %v144 = vpop.f32.mrf.mxu0
    %v145 = vadd.f32 0.0, %v144
    %146 = vdwg.mxu0
    %147 = vst [vmem:[%s2] sm:$0xff] %v96
    %148 = vst [vmem:[%s2 + $0x8] sm:$0xff] %v98
    %149 = vst [vmem:[%s2 + $0x10] sm:$0xff] %v139
    %150 = vst [vmem:[%s2 + $0x18] sm:$0xff] %v141
    %151 = vst [vmem:[%s2 + $0x20] sm:$0xff] %v100
    %152 = vst [vmem:[%s2 + $0x28] sm:$0xff] %v102
    %153 = vst [vmem:[%s2 + $0x30] sm:$0xff] %v143
    %154 = vst [vmem:[%s2 + $0x38] sm:$0xff] %v145
    // Predicated region
    $region14: #{apply.1} parent=1 // pred_check
      _
    $region15: #{apply.1} parent=1 // pred_check_branch
      %156 = sbr.rel (0) target = $region17
    $region16: #{apply.1} parent=1 // pred_region
      _
    $region17: #{apply.1} parent=1 // pred_fallthru
      _
    // Predicated region
    $region18: #{apply.1} parent=1 // pred_check
      _
    $region19: #{apply.1} parent=1 // pred_check_branch
      %158 = sbr.rel (0) target = $region21
    $region20: #{apply.1} parent=1 // pred_region
      _
    $region21: #{apply.1} parent=1 // pred_fallthru
      _
    %159 = vsyncpa [#allocation3], 1

</llo_original>
